<compile_context>
chip_gen: v7x
topology: tpu7x:2x2x1
jax: 0.10.0
libtpu: 0.0.40
codegen_flags: <defaults>
</compile_context>

<pallas_src>
import functools

import jax
import jax.numpy as jnp
from jax.experimental import pallas as pl
from jax.experimental.pallas import tpu as pltpu


def _detection_loss_kernel(logits_ref,   # VMEM (C, HW)  f32   channels on sublanes, HW on lanes
                           boxes_ref,    # VMEM (4, HW)  f32
                           idx_ref,      # VMEM (N, 1)   i32   flat center index per target
                           labels_ref,   # VMEM (N, 1)   i32
                           tgtbox_ref,   # VMEM (N, 4)   f32   target boxes (xyxy)
                           cls_out_ref,  # VMEM (1, 1)   f32   per-batch cls loss
                           box_out_ref,  # VMEM (1, 1)   f32   per-batch box loss
                           *, n_targets, n_classes):
    hw = logits_ref.shape[1]

    # In-kernel one-hot selection over the lane (HW) axis: (N, HW), no HBM traffic.
    lane_ids = jax.lax.broadcasted_iota(jnp.int32, (n_targets, hw), 1)
    sel = (lane_ids == idx_ref[...]).astype(jnp.float32)                    # (N, HW)

    # Gather predicted class logits / boxes at the target centers.
    # Contraction over HW (last dim of both operands) -> MXU.
    rows = jnp.einsum('nh,ch->nc', sel, logits_ref[...],
                      preferred_element_type=jnp.float32)                   # (N, C)
    pbox = jnp.einsum('nh,kh->nk', sel, boxes_ref[...],
                      preferred_element_type=jnp.float32)                   # (N, 4)

    # Cross-entropy (mean over N targets): logsumexp(logits) - logits[label]
    m = jnp.max(rows, axis=-1, keepdims=True)                               # (N, 1)
    lse = m + jnp.log(jnp.sum(jnp.exp(rows - m), axis=-1, keepdims=True))   # (N, 1)
    cls_iota = jax.lax.broadcasted_iota(jnp.int32, (n_targets, n_classes), 1)
    correct = jnp.sum(jnp.where(cls_iota == labels_ref[...], rows, 0.0),
                      axis=-1, keepdims=True)                               # (N, 1)
    cls_out_ref[...] = jnp.sum(lse - correct, axis=0, keepdims=True) / n_targets

    # L1 loss (mean over N*4 elements)
    l1 = jnp.sum(jnp.abs(pbox - tgtbox_ref[...]), axis=-1, keepdims=True)   # (N, 1)
    box_out_ref[...] = jnp.sum(l1, axis=0, keepdims=True) / (n_targets * 4)


def detection_loss(pred_logits, pred_boxes, tgt_boxes, tgt_labels):
    """pred_logits: (B, C, H, W), pred_boxes: (B, 4, H, W),
    tgt_boxes: (B, N, 4) in [0,1] xyxy, tgt_labels: (B, N) int32.
    Every batch element is assumed to have N (>0) targets."""
    B, C, H, W = pred_logits.shape
    N = tgt_labels.shape[1]
    HW = H * W

    # Pure reshape (no transpose/copy): keep channels on sublanes, HW on lanes.
    logits_chw = pred_logits.reshape(B, C, HW).astype(jnp.float32)
    boxes_chw = pred_boxes.reshape(B, 4, HW).astype(jnp.float32)

    # centers = box center, scaled by H, truncated, clamped to [0, H-1]
    # (exactly mirrors the PyTorch code, including using H for both axes).
    tgt_boxes = tgt_boxes.astype(jnp.float32)
    centers = tgt_boxes[:, :, :2] + (tgt_boxes[:, :, 2:] - tgt_boxes[:, :, :2]) / 2.0
    centers = jnp.clip((centers * H).astype(jnp.int32), 0, H - 1)
    cx = centers[:, :, 0]
    cy = centers[:, :, 1]
    flat_idx = (cy * W + cx).astype(jnp.int32)[..., None]       # (B, N, 1)
    labels = tgt_labels.astype(jnp.int32)[..., None]            # (B, N, 1)

    kernel = functools.partial(_detection_loss_kernel, n_targets=N, n_classes=C)

    grid_spec = pltpu.PrefetchScalarGridSpec(
        num_scalar_prefetch=0,
        grid=(B,),
        in_specs=[
            pl.BlockSpec((None, C, HW), lambda b: (b, 0, 0)),
            pl.BlockSpec((None, 4, HW), lambda b: (b, 0, 0)),
            pl.BlockSpec((None, N, 1), lambda b: (b, 0, 0)),
            pl.BlockSpec((None, N, 1), lambda b: (b, 0, 0)),
            pl.BlockSpec((None, N, 4), lambda b: (b, 0, 0)),
        ],
        out_specs=[
            pl.BlockSpec((None, 1, 1), lambda b: (b, 0, 0)),
            pl.BlockSpec((None, 1, 1), lambda b: (b, 0, 0)),
        ],
    )

    cls_partial, box_partial = pl.pallas_call(
        kernel,
        grid_spec=grid_spec,
        out_shape=(
            jax.ShapeDtypeStruct((B, 1, 1), jnp.float32),
            jax.ShapeDtypeStruct((B, 1, 1), jnp.float32),
        ),
        compiler_params=pltpu.CompilerParams(
            dimension_semantics=("parallel",)),
    )(logits_chw, boxes_chw, flat_idx, labels, tgt_boxes)

    # All batches are assumed valid (non-empty targets) -> mean over B (tiny XLA reduce).
    # TODO(synk): the PyTorch module's "skip empty-target batches / return None" branch is
    # data-dependent control flow and is not implemented (all batches assumed non-empty).
    return jnp.mean(cls_partial), jnp.mean(box_partial)


def detection_loss_ref(pred_logits, pred_boxes, tgt_boxes, tgt_labels):
    """Pure-JAX reference mirroring the PyTorch forward."""
    B, C, H, W = pred_logits.shape
    cls_total = 0.0
    box_total = 0.0
    for i in range(B):
        boxes = tgt_boxes[i]
        labels = tgt_labels[i]
        centers = boxes[:, :2] + (boxes[:, 2:] - boxes[:, :2]) / 2.0
        centers = jnp.clip((centers * H).astype(jnp.int32), 0, H - 1)
        cx, cy = centers[:, 0], centers[:, 1]
        pc = jnp.transpose(pred_logits[i], (1, 2, 0))[cy, cx]   # (N, C)
        pb = jnp.transpose(pred_boxes[i], (1, 2, 0))[cy, cx]    # (N, 4)
        lse = jax.scipy.special.logsumexp(pc, axis=-1)
        correct = jnp.take_along_axis(pc, labels[:, None], axis=-1)[:, 0]
        cls_total += jnp.mean(lse - correct)
        box_total += jnp.mean(jnp.abs(pb - boxes))
    return cls_total / B, box_total / B


if __name__ == "__main__":
    key = jax.random.PRNGKey(0)
    B, C, H, W, N = 2, 8, 16, 16, 4
    k1, k2, k3, k4 = jax.random.split(key, 4)

    pred_logits = jax.random.normal(k1, (B, C, H, W), jnp.float32)
    pred_boxes = jax.random.normal(k2, (B, 4, H, W), jnp.float32)

    # Random xyxy boxes in [0, 1] with x1<=x2, y1<=y2; N targets per image.
    p = jax.random.uniform(k3, (B, N, 2, 2), jnp.float32)
    xy1 = jnp.min(p, axis=2)
    xy2 = jnp.max(p, axis=2)
    tgt_boxes = jnp.concatenate([xy1, xy2], axis=-1)            # (B, N, 4)
    tgt_labels = jax.random.randint(k4, (B, N), 0, C, jnp.int32)

    cls_l, box_l = detection_loss(pred_logits, pred_boxes, tgt_boxes, tgt_labels)
    jax.block_until_ready((cls_l, box_l))

    ref_cls, ref_box = detection_loss_ref(pred_logits, pred_boxes, tgt_boxes, tgt_labels)
    assert jnp.allclose(cls_l, ref_cls, atol=1e-4, rtol=1e-4), (cls_l, ref_cls)
    assert jnp.allclose(box_l, ref_box, atol=1e-4, rtol=1e-4), (box_l, ref_box)

    print("KERNEL_OK")
</pallas_src>

<mosaic_0001>
module attributes {stable_mosaic.version = 11 : i64} {
  func.func @_detection_loss_kernel(%arg0: i32, %arg1: memref<1x8x256xf32, #tpu.memory_space<vmem>>, %arg2: memref<1x4x256xf32, #tpu.memory_space<vmem>>, %arg3: memref<1x4x1xi32, #tpu.memory_space<vmem>>, %arg4: memref<1x4x1xi32, #tpu.memory_space<vmem>>, %arg5: memref<1x4x4xf32, #tpu.memory_space<vmem>>, %arg6: memref<1x1x1xf32, #tpu.memory_space<vmem>>, %arg7: memref<1x1x1xf32, #tpu.memory_space<vmem>>) attributes {dimension_semantics = [#tpu.dimension_semantics<parallel>], iteration_bounds = array<i64: 2>, scalar_prefetch = 0 : i64, scratch_operands = 0 : i64, tpu.core_type = #tpu.core_type<tc>, window_params = [{transform_indices = @transform_0, window_bounds = array<i64: 1, 8, 256>}, {transform_indices = @transform_1, window_bounds = array<i64: 1, 4, 256>}, {transform_indices = @transform_2, window_bounds = array<i64: 1, 4, 1>}, {transform_indices = @transform_3, window_bounds = array<i64: 1, 4, 1>}, {transform_indices = @transform_4, window_bounds = array<i64: 1, 4, 4>}, {transform_indices = @transform_5, window_bounds = array<i64: 1, 1, 1>}, {transform_indices = @transform_6, window_bounds = array<i64: 1, 1, 1>}]} {
    %0 = tpu.iota {dimensions = array<i32: 1>} : vector<4x256xi32>
    %c0 = arith.constant 0 : index
    %c0_0 = arith.constant 0 : index
    %c0_1 = arith.constant 0 : index
    %1 = vector.load %arg3[%c0, %c0_0, %c0_1] : memref<1x4x1xi32, #tpu.memory_space<vmem>>, vector<1x4x1xi32>
    %2 = vector.shape_cast %1 : vector<1x4x1xi32> to vector<4x1xi32>
    %3 = vector.broadcast %2 : vector<4x1xi32> to vector<4x256xi32>
    %4 = arith.cmpi eq, %0, %3 : vector<4x256xi32>
    %5 = arith.extui %4 : vector<4x256xi1> to vector<4x256xi32>
    %6 = arith.sitofp %5 : vector<4x256xi32> to vector<4x256xf32>
    %c0_2 = arith.constant 0 : index
    %c0_3 = arith.constant 0 : index
    %c0_4 = arith.constant 0 : index
    %7 = vector.load %arg1[%c0_2, %c0_3, %c0_4] : memref<1x8x256xf32, #tpu.memory_space<vmem>>, vector<1x8x256xf32>
    %8 = vector.shape_cast %7 : vector<1x8x256xf32> to vector<8x256xf32>
    "tpu.trace_start"() <{level = 10 : i32, message = "nh,ch->nc"}> : () -> ()
    %cst = arith.constant dense<0.000000e+00> : vector<4x8xf32>
    %9 = tpu.matmul %6, %8, %cst {dimension_numbers = #tpu.dot_dimension_numbers<[1], [1], [0], [0], [0, 0, 1, 0], [], []>} : vector<4x256xf32>, vector<8x256xf32>, vector<4x8xf32> -> vector<4x8xf32>
    "tpu.trace_stop"() : () -> ()
    %c0_5 = arith.constant 0 : index
    %c0_6 = arith.constant 0 : index
    %c0_7 = arith.constant 0 : index
    %10 = vector.load %arg2[%c0_5, %c0_6, %c0_7] : memref<1x4x256xf32, #tpu.memory_space<vmem>>, vector<1x4x256xf32>
    %11 = vector.shape_cast %10 : vector<1x4x256xf32> to vector<4x256xf32>
    "tpu.trace_start"() <{level = 10 : i32, message = "nh,kh->nk"}> : () -> ()
    %cst_8 = arith.constant dense<0.000000e+00> : vector<4x4xf32>
    %12 = tpu.matmul %6, %11, %cst_8 {dimension_numbers = #tpu.dot_dimension_numbers<[1], [1], [0], [0], [0, 0, 1, 0], [], []>} : vector<4x256xf32>, vector<4x256xf32>, vector<4x4xf32> -> vector<4x4xf32>
    "tpu.trace_stop"() : () -> ()
    %cst_9 = arith.constant dense<0xFF800000> : vector<4xf32>
    %13 = vector.multi_reduction <maximumf>, %9, %cst_9 [1] : vector<4x8xf32> to vector<4xf32>
    %14 = vector.shape_cast %13 : vector<4xf32> to vector<4x1xf32>
    %15 = vector.broadcast %14 : vector<4x1xf32> to vector<4x8xf32>
    %16 = arith.subf %9, %15 : vector<4x8xf32>
    %17 = math.exp %16 : vector<4x8xf32>
    %cst_10 = arith.constant dense<0.000000e+00> : vector<4xf32>
    %18 = vector.multi_reduction <add>, %17, %cst_10 [1] : vector<4x8xf32> to vector<4xf32>
    %19 = vector.shape_cast %18 : vector<4xf32> to vector<4x1xf32>
    %20 = math.log %19 : vector<4x1xf32>
    %21 = arith.addf %14, %20 : vector<4x1xf32>
    %22 = tpu.iota {dimensions = array<i32: 1>} : vector<4x8xi32>
    %c0_11 = arith.constant 0 : index
    %c0_12 = arith.constant 0 : index
    %c0_13 = arith.constant 0 : index
    %23 = vector.load %arg4[%c0_11, %c0_12, %c0_13] : memref<1x4x1xi32, #tpu.memory_space<vmem>>, vector<1x4x1xi32>
    %24 = vector.shape_cast %23 : vector<1x4x1xi32> to vector<4x1xi32>
    %25 = vector.broadcast %24 : vector<4x1xi32> to vector<4x8xi32>
    %26 = arith.cmpi eq, %22, %25 : vector<4x8xi32>
    %cst_14 = arith.constant 0.000000e+00 : f32
    %27 = vector.broadcast %cst_14 : f32 to vector<4x8xf32>
    %28 = arith.select %26, %9, %27 : vector<4x8xi1>, vector<4x8xf32>
    %cst_15 = arith.constant dense<0.000000e+00> : vector<4xf32>
    %29 = vector.multi_reduction <add>, %28, %cst_15 [1] : vector<4x8xf32> to vector<4xf32>
    %30 = vector.shape_cast %29 : vector<4xf32> to vector<4x1xf32>
    %31 = arith.subf %21, %30 : vector<4x1xf32>
    %cst_16 = arith.constant dense<0.000000e+00> : vector<1xf32>
    %32 = vector.multi_reduction <add>, %31, %cst_16 [0] : vector<4x1xf32> to vector<1xf32>
    %33 = vector.shape_cast %32 : vector<1xf32> to vector<1x1xf32>
    %cst_17 = arith.constant 4.000000e+00 : f32
    %34 = vector.broadcast %cst_17 : f32 to vector<1x1xf32>
    %35 = arith.divf %33, %34 : vector<1x1xf32>
    %c0_18 = arith.constant 0 : index
    %c0_19 = arith.constant 0 : index
    %c0_20 = arith.constant 0 : index
    %36 = vector.load %arg6[%c0_18, %c0_19, %c0_20] : memref<1x1x1xf32, #tpu.memory_space<vmem>>, vector<1x1x1xf32>
    %37 = vector.shape_cast %36 : vector<1x1x1xf32> to vector<1x1xf32>
    %38 = vector.shape_cast %35 : vector<1x1xf32> to vector<1x1x1xf32>
    tpu.vector_store %arg6[%c0_18, %c0_19, %c0_20], %38 {strides = array<i32>} : memref<1x1x1xf32, #tpu.memory_space<vmem>>, vector<1x1x1xf32>,
    %c0_21 = arith.constant 0 : index
    %c0_22 = arith.constant 0 : index
    %c0_23 = arith.constant 0 : index
    %39 = vector.load %arg5[%c0_21, %c0_22, %c0_23] : memref<1x4x4xf32, #tpu.memory_space<vmem>>, vector<1x4x4xf32>
    %40 = vector.shape_cast %39 : vector<1x4x4xf32> to vector<4x4xf32>
    %41 = arith.subf %12, %40 : vector<4x4xf32>
    %42 = math.absf %41 : vector<4x4xf32>
    %cst_24 = arith.constant dense<0.000000e+00> : vector<4xf32>
    %43 = vector.multi_reduction <add>, %42, %cst_24 [1] : vector<4x4xf32> to vector<4xf32>
    %44 = vector.shape_cast %43 : vector<4xf32> to vector<4x1xf32>
    %cst_25 = arith.constant dense<0.000000e+00> : vector<1xf32>
    %45 = vector.multi_reduction <add>, %44, %cst_25 [0] : vector<4x1xf32> to vector<1xf32>
    %46 = vector.shape_cast %45 : vector<1xf32> to vector<1x1xf32>
    %cst_26 = arith.constant 1.600000e+01 : f32
    %47 = vector.broadcast %cst_26 : f32 to vector<1x1xf32>
    %48 = arith.divf %46, %47 : vector<1x1xf32>
    %c0_27 = arith.constant 0 : index
    %c0_28 = arith.constant 0 : index
    %c0_29 = arith.constant 0 : index
    %49 = vector.load %arg7[%c0_27, %c0_28, %c0_29] : memref<1x1x1xf32, #tpu.memory_space<vmem>>, vector<1x1x1xf32>
    %50 = vector.shape_cast %49 : vector<1x1x1xf32> to vector<1x1xf32>
    %51 = vector.shape_cast %48 : vector<1x1xf32> to vector<1x1x1xf32>
    tpu.vector_store %arg7[%c0_27, %c0_28, %c0_29], %51 {strides = array<i32>} : memref<1x1x1xf32, #tpu.memory_space<vmem>>, vector<1x1x1xf32>,
    return
  }
  func.func @transform_0(%arg0: i32) -> (i32, i32, i32) {
    %c0_i32 = arith.constant 0 : i32
    %c0_i32_0 = arith.constant 0 : i32
    %c0_i32_1 = arith.constant 0 : i32
    return %arg0, %c0_i32, %c0_i32_0 : i32, i32, i32
  }
  func.func @transform_1(%arg0: i32) -> (i32, i32, i32) {
    %c0_i32 = arith.constant 0 : i32
    %c0_i32_0 = arith.constant 0 : i32
    %c0_i32_1 = arith.constant 0 : i32
    return %arg0, %c0_i32, %c0_i32_0 : i32, i32, i32
  }
  func.func @transform_2(%arg0: i32) -> (i32, i32, i32) {
    %c0_i32 = arith.constant 0 : i32
    %c0_i32_0 = arith.constant 0 : i32
    %c0_i32_1 = arith.constant 0 : i32
    return %arg0, %c0_i32, %c0_i32_0 : i32, i32, i32
  }
  func.func @transform_3(%arg0: i32) -> (i32, i32, i32) {
    %c0_i32 = arith.constant 0 : i32
    %c0_i32_0 = arith.constant 0 : i32
    %c0_i32_1 = arith.constant 0 : i32
    return %arg0, %c0_i32, %c0_i32_0 : i32, i32, i32
  }
  func.func @transform_4(%arg0: i32) -> (i32, i32, i32) {
    %c0_i32 = arith.constant 0 : i32
    %c0_i32_0 = arith.constant 0 : i32
    %c0_i32_1 = arith.constant 0 : i32
    return %arg0, %c0_i32, %c0_i32_0 : i32, i32, i32
  }
  func.func @transform_5(%arg0: i32) -> (i32, i32, i32) {
    %c0_i32 = arith.constant 0 : i32
    %c0_i32_0 = arith.constant 0 : i32
    %c0_i32_1 = arith.constant 0 : i32
    return %arg0, %c0_i32, %c0_i32_0 : i32, i32, i32
  }
  func.func @transform_6(%arg0: i32) -> (i32, i32, i32) {
    %c0_i32 = arith.constant 0 : i32
    %c0_i32_0 = arith.constant 0 : i32
    %c0_i32_1 = arith.constant 0 : i32
    return %arg0, %c0_i32, %c0_i32_0 : i32, i32, i32
  }
}

</mosaic_0001>

<llo_original>
// kernel: tpu_custom_call.1
$region0: #{tpu_custom_call.1}
  #allocation0 [shape = 'u32[]', space=smem, size = 0x4, offset = 0x4, fixed_abs, tag = 'smem constant byte address 0x4 - core index']
  #allocation1 [shape = 'u32[144,128]{1,0:T(1,128)}', space=vmem, size = 0x12000, scoped, tag = 'internal scratch']
  %s0 = inlined_call_operand.hbm [shape: f32[2,8,256], index: 0, kind: input, shape index: {}]
  %s1 = inlined_call_operand.vmem [shape: f32[2,4,256], index: 1, kind: input, shape index: {}]
  %s2 = inlined_call_operand.vmem [shape: s32[2,4,1], index: 2, kind: input, shape index: {}]
  %s3 = inlined_call_operand.vmem [shape: s32[2,4,1], index: 3, kind: input, shape index: {}]
  %s4 = inlined_call_operand.vmem [shape: f32[2,4,4], index: 4, kind: input, shape index: {}]
  %s5 = inlined_call_operand.vmem [shape: f32[2,1,1], index: 5, kind: output, shape index: {0}]
  %s6 = inlined_call_operand.vmem [shape: f32[2,1,1], index: 6, kind: output, shape index: {1}]
  %7 = xla_tuple %s5, %s6
  %s8 = sld [smem:[#allocation0]]
  $region65: #{tpu_custom_call.1} parent=0
    _
  %s10 = ssub.s32 1, %s8
  %s11 = scalar_select 0, %s10, %s8
  $region1: #{tpu_custom_call.1} parent=0
    #allocation2 [shape = 'u8[16384]{0}', space=vmem, size = 0x4000, scoped, tag = 'input window, operand 0']
    #allocation3 [shape = 's32[2]{0}', space=sflag, size = 0x8, scoped, tag = 'scoped memory for tpu_custom_call.1']
    %12 = vsyncpa [#allocation3], 0
    %s13 = scalar_lea.sflag [#allocation3], 1
    %14 = vsyncpa %s13, 0
    loop: start=0, step=1, limit=4
    $region2: #{tpu_custom_call.1} parent=1 // loop_pre_header
      _
    $region3: #{tpu_custom_call.1} parent=1 // loop_header
      %s16 = sphi 0, %s20
      %p17 = scmp.ge.s32.totalorder %s16, 4
      %s26 = sphi 0, %s28
      %s29 = sphi 0, %s26
      %s30 = sphi 0, %s29
      %s46 = sphi 0, %s30
      %s52 = sphi 0, %s54
      %s55 = sphi 0, %s52
      %s56 = sphi 0, %s55
      %s72 = sphi 0, %s56
      %s78 = sphi 0, %s80
      %s81 = sphi 0, %s78
      %s82 = sphi 0, %s81
      %s98 = sphi 0, %s82
      %s104 = sphi 0, %s106
      %s107 = sphi 0, %s104
      %s108 = sphi 0, %s107
      %s124 = sphi 0, %s108
      %s130 = sphi 0, %s132
      %s133 = sphi 0, %s130
      %s134 = sphi 0, %s133
      %s150 = sphi 0, %s134
      %s156 = sphi 0, %s158
      %s159 = sphi 0, %s156
      %s160 = sphi 0, %s159
      %s176 = sphi 0, %s160
      %s182 = sphi 0, %s184
      %s185 = sphi 0, %s182
      %s186 = sphi 0, %s185
      %s202 = sphi 0, %s186
    $region4: #{tpu_custom_call.1} parent=1 // loop_header_branch
      %19 = sbr.rel (%p17) target = $region8
    $region5: #{tpu_custom_call.1} parent=1 // loop_body
      %s21 = ssub.s32 %s16, 1
      %s22 = ssub.s32 %s16, 2
      %s23 = sadd.s32 %s16, 1
      %s24 = ssub.s32 %s16, %s23
      %p25 = scmp.eq.s32.totalorder %s24, 0
      %s27 = sadd.s32 %s26, 1
      %s28 = scalar_select %p25, %s26, %s27
      %p31 = pneg %p25
      %p32 = scmp.eq.s32.totalorder %s16, 1
      %p33 = por %p31, %p32
      %p34 = scmp.ne.s32.totalorder %s26, %s29
      %p35 = scmp.eq.s32.totalorder %s16, 0
      %p36 = por %p34, %p35
      %p37 = scmp.ne.s32.totalorder %s26, %s29
      %p38 = scmp.eq.s32.totalorder %s21, 1
      %p39 = por %p37, %p38
      %p40 = scmp.ne.s32.totalorder %s29, %s30
      %p41 = scmp.eq.s32.totalorder %s21, 0
      %p42 = por %p40, %p41
      %p43 = scmp.ne.s32.totalorder %s29, %s30
      %p44 = scmp.eq.s32.totalorder %s22, 1
      %p45 = por %p43, %p44
      %p47 = scmp.ne.s32.totalorder %s30, %s46
      %p48 = scmp.eq.s32.totalorder %s22, 0
      %p49 = por %p47, %p48
      %s50 = ssub.s32 %s16, %s23
      %p51 = scmp.eq.s32.totalorder %s50, 0
      %s53 = sadd.s32 %s52, 1
      %s54 = scalar_select %p51, %s52, %s53
      %p57 = pneg %p51
      %p58 = scmp.eq.s32.totalorder %s16, 1
      %p59 = por %p57, %p58
      %p60 = scmp.ne.s32.totalorder %s52, %s55
      %p61 = scmp.eq.s32.totalorder %s16, 0
      %p62 = por %p60, %p61
      %p63 = scmp.ne.s32.totalorder %s52, %s55
      %p64 = scmp.eq.s32.totalorder %s21, 1
      %p65 = por %p63, %p64
      %p66 = scmp.ne.s32.totalorder %s55, %s56
      %p67 = scmp.eq.s32.totalorder %s21, 0
      %p68 = por %p66, %p67
      %p69 = scmp.ne.s32.totalorder %s55, %s56
      %p70 = scmp.eq.s32.totalorder %s22, 1
      %p71 = por %p69, %p70
      %p73 = scmp.ne.s32.totalorder %s56, %s72
      %p74 = scmp.eq.s32.totalorder %s22, 0
      %p75 = por %p73, %p74
      %s76 = ssub.s32 %s16, %s23
      %p77 = scmp.eq.s32.totalorder %s76, 0
      %s79 = sadd.s32 %s78, 1
      %s80 = scalar_select %p77, %s78, %s79
      %p83 = pneg %p77
      %p84 = scmp.eq.s32.totalorder %s16, 1
      %p85 = por %p83, %p84
      %p86 = scmp.ne.s32.totalorder %s78, %s81
      %p87 = scmp.eq.s32.totalorder %s16, 0
      %p88 = por %p86, %p87
      %p89 = scmp.ne.s32.totalorder %s78, %s81
      %p90 = scmp.eq.s32.totalorder %s21, 1
      %p91 = por %p89, %p90
      %p92 = scmp.ne.s32.totalorder %s81, %s82
      %p93 = scmp.eq.s32.totalorder %s21, 0
      %p94 = por %p92, %p93
      %p95 = scmp.ne.s32.totalorder %s81, %s82
      %p96 = scmp.eq.s32.totalorder %s22, 1
      %p97 = por %p95, %p96
      %p99 = scmp.ne.s32.totalorder %s82, %s98
      %p100 = scmp.eq.s32.totalorder %s22, 0
      %p101 = por %p99, %p100
      %s102 = ssub.s32 %s16, %s23
      %p103 = scmp.eq.s32.totalorder %s102, 0
      %s105 = sadd.s32 %s104, 1
      %s106 = scalar_select %p103, %s104, %s105
      %p109 = pneg %p103
      %p110 = scmp.eq.s32.totalorder %s16, 1
      %p111 = por %p109, %p110
      %p112 = scmp.ne.s32.totalorder %s104, %s107
      %p113 = scmp.eq.s32.totalorder %s16, 0
      %p114 = por %p112, %p113
      %p115 = scmp.ne.s32.totalorder %s104, %s107
      %p116 = scmp.eq.s32.totalorder %s21, 1
      %p117 = por %p115, %p116
      %p118 = scmp.ne.s32.totalorder %s107, %s108
      %p119 = scmp.eq.s32.totalorder %s21, 0
      %p120 = por %p118, %p119
      %p121 = scmp.ne.s32.totalorder %s107, %s108
      %p122 = scmp.eq.s32.totalorder %s22, 1
      %p123 = por %p121, %p122
      %p125 = scmp.ne.s32.totalorder %s108, %s124
      %p126 = scmp.eq.s32.totalorder %s22, 0
      %p127 = por %p125, %p126
      %s128 = ssub.s32 %s16, %s23
      %p129 = scmp.eq.s32.totalorder %s128, 0
      %s131 = sadd.s32 %s130, 1
      %s132 = scalar_select %p129, %s130, %s131
      %p135 = pneg %p129
      %p136 = scmp.eq.s32.totalorder %s16, 1
      %p137 = por %p135, %p136
      %p138 = scmp.ne.s32.totalorder %s130, %s133
      %p139 = scmp.eq.s32.totalorder %s16, 0
      %p140 = por %p138, %p139
      %p141 = scmp.ne.s32.totalorder %s130, %s133
      %p142 = scmp.eq.s32.totalorder %s21, 1
      %p143 = por %p141, %p142
      %p144 = scmp.ne.s32.totalorder %s133, %s134
      %p145 = scmp.eq.s32.totalorder %s21, 0
      %p146 = por %p144, %p145
      %p147 = scmp.ne.s32.totalorder %s133, %s134
      %p148 = scmp.eq.s32.totalorder %s22, 1
      %p149 = por %p147, %p148
      %p151 = scmp.ne.s32.totalorder %s134, %s150
      %p152 = scmp.eq.s32.totalorder %s22, 0
      %p153 = por %p151, %p152
      %s154 = ssub.s32 %s16, %s23
      %p155 = scmp.eq.s32.totalorder %s154, 0
      %s157 = sadd.s32 %s156, 1
      %s158 = scalar_select %p155, %s156, %s157
      %p161 = pneg %p155
      %p162 = scmp.eq.s32.totalorder %s16, 1
      %p163 = por %p161, %p162
      %p164 = scmp.ne.s32.totalorder %s156, %s159
      %p165 = scmp.eq.s32.totalorder %s16, 0
      %p166 = por %p164, %p165
      %p167 = scmp.ne.s32.totalorder %s156, %s159
      %p168 = scmp.eq.s32.totalorder %s21, 1
      %p169 = por %p167, %p168
      %p170 = scmp.ne.s32.totalorder %s159, %s160
      %p171 = scmp.eq.s32.totalorder %s21, 0
      %p172 = por %p170, %p171
      %p173 = scmp.ne.s32.totalorder %s159, %s160
      %p174 = scmp.eq.s32.totalorder %s22, 1
      %p175 = por %p173, %p174
      %p177 = scmp.ne.s32.totalorder %s160, %s176
      %p178 = scmp.eq.s32.totalorder %s22, 0
      %p179 = por %p177, %p178
      %s180 = ssub.s32 %s16, %s23
      %p181 = scmp.eq.s32.totalorder %s180, 0
      %s183 = sadd.s32 %s182, 1
      %s184 = scalar_select %p181, %s182, %s183
      %p187 = pneg %p181
      %p188 = scmp.eq.s32.totalorder %s16, 1
      %p189 = por %p187, %p188
      %p190 = scmp.ne.s32.totalorder %s182, %s185
      %p191 = scmp.eq.s32.totalorder %s16, 0
      %p192 = por %p190, %p191
      %p193 = scmp.ne.s32.totalorder %s182, %s185
      %p194 = scmp.eq.s32.totalorder %s21, 1
      %p195 = por %p193, %p194
      %p196 = scmp.ne.s32.totalorder %s185, %s186
      %p197 = scmp.eq.s32.totalorder %s21, 0
      %p198 = por %p196, %p197
      %p199 = scmp.ne.s32.totalorder %s185, %s186
      %p200 = scmp.eq.s32.totalorder %s22, 1
      %p201 = por %p199, %p200
      %p203 = scmp.ne.s32.totalorder %s186, %s202
      %p204 = scmp.eq.s32.totalorder %s22, 0
      %p205 = por %p203, %p204
      %p206 = scmp.le.s32.totalorder 1, %s16
      %p207 = scmp.lt.s32.totalorder %s16, 3
      %p208 = pnand %p206, %p207
      %p209 = pneg %p208
      // Predicated region
      $region9: #{tpu_custom_call.1} parent=5 // pred_check
        _
      $region10: #{tpu_custom_call.1} parent=5 // pred_check_branch
        %211 = sbr.rel (%p208) target = $region12
      $region11: #{tpu_custom_call.1} parent=5 // pred_region
        %s212 = ssub.s32 %s16, 1
      $region12: #{tpu_custom_call.1} parent=5 // pred_fallthru
        _
      %p213 = scmp.lt.s32.totalorder %s16, 2
      // Predicated region
      $region13: #{tpu_custom_call.1} parent=5 // pred_check
        %p214 = pneg %p213
      $region14: #{tpu_custom_call.1} parent=5 // pred_check_branch
        %216 = sbr.rel (%p214) target = $region16
      $region15: #{tpu_custom_call.1} parent=5 // pred_region
        // Predicated region
        $region17: #{tpu_custom_call.1} parent=15 // pred_check
          %p217 = pneg %p36
        $region18: #{tpu_custom_call.1} parent=15 // pred_check_branch
          %219 = sbr.rel (%p217) target = $region20
        $region19: #{tpu_custom_call.1} parent=15 // pred_region
          %s220 = sand.u32 %s26, 1
          %s221 = scalar_lea.sflag [#allocation3], %s220
          %s222 = sand.u32 %s26, 1
          %s223 = smul.addr %s222, 16
          %s224 = scalar_lea.vmem [#allocation2], %s223
          %s226 = ssub.s32 256, 256
          %227 = vsyncadd %s221, %s226
          %s228 = smul.addr %s16, 2
          %s229 = smul.addr %s228, 128
          %s230 = scalar_lea.hbm %s0, %s229
          %s232 = sshll.u32 %s224, 4
          %s233 = int_to_ptr.vmem [resolvable:$true] %s232
          %235 = dma.hbm_to_vmem [thread:$0]  %s230, 256, %s233, %s221
        $region20: #{tpu_custom_call.1} parent=15 // pred_fallthru
          _
        // Predicated region
        $region21: #{tpu_custom_call.1} parent=15 // pred_check
          %p236 = pneg %p62
        $region22: #{tpu_custom_call.1} parent=15 // pred_check_branch
          %238 = sbr.rel (%p236) target = $region24
        $region23: #{tpu_custom_call.1} parent=15 // pred_region
          %p239 = scmp.lt.s32.totalorder %s16, 1
          %s240 = scalar_select %p239, %s16, 1
          %s241 = smul.addr %s240, 2
          %s242 = smul.addr %s241, 4
          %s243 = scalar_lea.vmem %s1, %s242
        $region24: #{tpu_custom_call.1} parent=15 // pred_fallthru
          _
        // Predicated region
        $region25: #{tpu_custom_call.1} parent=15 // pred_check
          %p244 = pneg %p88
        $region26: #{tpu_custom_call.1} parent=15 // pred_check_branch
          %246 = sbr.rel (%p244) target = $region28
        $region27: #{tpu_custom_call.1} parent=15 // pred_region
          %p247 = scmp.lt.s32.totalorder %s16, 1
          %s248 = scalar_select %p247, %s16, 1
          %s249 = smul.addr %s248, 4
          %s250 = scalar_lea.vmem %s2, %s249
        $region28: #{tpu_custom_call.1} parent=15 // pred_fallthru
          _
        // Predicated region
        $region29: #{tpu_custom_call.1} parent=15 // pred_check
          %p251 = pneg %p114
        $region30: #{tpu_custom_call.1} parent=15 // pred_check_branch
          %253 = sbr.rel (%p251) target = $region32
        $region31: #{tpu_custom_call.1} parent=15 // pred_region
          %p254 = scmp.lt.s32.totalorder %s16, 1
          %s255 = scalar_select %p254, %s16, 1
          %s256 = smul.addr %s255, 4
          %s257 = scalar_lea.vmem %s3, %s256
        $region32: #{tpu_custom_call.1} parent=15 // pred_fallthru
          _
        // Predicated region
        $region33: #{tpu_custom_call.1} parent=15 // pred_check
          %p258 = pneg %p140
        $region34: #{tpu_custom_call.1} parent=15 // pred_check_branch
          %260 = sbr.rel (%p258) target = $region36
        $region35: #{tpu_custom_call.1} parent=15 // pred_region
          %p261 = scmp.lt.s32.totalorder %s16, 1
          %s262 = scalar_select %p261, %s16, 1
          %s263 = smul.addr %s262, 4
          %s264 = scalar_lea.vmem %s4, %s263
        $region36: #{tpu_custom_call.1} parent=15 // pred_fallthru
          _
      $region16: #{tpu_custom_call.1} parent=5 // pred_fallthru
        _
      %p265 = scmp.le.s32.totalorder 1, %s16
      %p266 = scmp.lt.s32.totalorder %s16, 3
      %p267 = pnand %p265, %p266
      %p268 = pneg %p267
      // Predicated region
      $region37: #{tpu_custom_call.1} parent=5 // pred_check
        _
      $region38: #{tpu_custom_call.1} parent=5 // pred_check_branch
        %270 = sbr.rel (%p267) target = $region40
      $region39: #{tpu_custom_call.1} parent=5 // pred_region
        %s271 = ssub.s32 %s16, 1
        %s272 = sand.u32 %s29, 1
        %s273 = scalar_lea.sflag [#allocation3], %s272
        %s274 = sand.u32 %s29, 1
        %s275 = smul.addr %s274, 16
        %s276 = scalar_lea.vmem [#allocation2], %s275
        // Predicated region
        $region41: #{tpu_custom_call.1} parent=39 // pred_check
          %p277 = pneg %p42
        $region42: #{tpu_custom_call.1} parent=39 // pred_check_branch
          %279 = sbr.rel (%p277) target = $region44
        $region43: #{tpu_custom_call.1} parent=39 // pred_region
          %280 = dma.done %s273, 256
        $region44: #{tpu_custom_call.1} parent=39 // pred_fallthru
          _
        %s281 = sand.u32 %s29, 1
        %s282 = scalar_lea.sflag [#allocation3], %s281
        %s283 = sand.u32 %s29, 1
        %s284 = smul.addr %s283, 16
        %s285 = scalar_lea.vmem [#allocation2], %s284
        %p286 = pneg %p42
        %p287 = pneg %p39
        %p288 = scmp.lt.s32.totalorder %s21, 1
        %s289 = scalar_select %p288, %s21, 1
        %s290 = smul.addr %s289, 2
        %s291 = smul.addr %s290, 4
        %s292 = scalar_lea.vmem %s1, %s291
        %p293 = pneg %p68
        %p294 = pneg %p65
        %p295 = scmp.lt.s32.totalorder %s21, 1
        %s296 = scalar_select %p295, %s21, 1
        %s297 = smul.addr %s296, 4
        %s298 = scalar_lea.vmem %s2, %s297
        %p299 = pneg %p94
        %p300 = pneg %p91
        %p301 = scmp.lt.s32.totalorder %s21, 1
        %s302 = scalar_select %p301, %s21, 1
        %s303 = smul.addr %s302, 4
        %s304 = scalar_lea.vmem %s3, %s303
        %p305 = pneg %p120
        %p306 = pneg %p117
        %p307 = scmp.lt.s32.totalorder %s21, 1
        %s308 = scalar_select %p307, %s21, 1
        %s309 = smul.addr %s308, 4
        %s310 = scalar_lea.vmem %s4, %s309
        %p311 = pneg %p146
        %p312 = pneg %p143
        %p313 = pneg %p172
        %p314 = pneg %p169
        %p315 = scmp.lt.s32.totalorder %s21, 1
        %s316 = scalar_select %p315, %s21, 1
        %s317 = scalar_lea.vmem %s5, %s316
        %p318 = pneg %p198
        %p319 = pneg %p195
        %p320 = scmp.lt.s32.totalorder %s21, 1
        %s321 = scalar_select %p320, %s21, 1
        %s322 = scalar_lea.vmem %s6, %s321
        %p323 = scmp.lt.s32.totalorder %s21, 1
        %s324 = scalar_select %p323, %s21, 1
        %s325 = smul.addr %s324, 2
        %s326 = smul.addr %s325, 4
        %s327 = scalar_lea.vmem %s1, %s326
        %p328 = scmp.lt.s32.totalorder %s21, 1
        %s329 = scalar_select %p328, %s21, 1
        %s330 = smul.addr %s329, 4
        %s331 = scalar_lea.vmem %s2, %s330
        %p332 = scmp.lt.s32.totalorder %s21, 1
        %s333 = scalar_select %p332, %s21, 1
        %s334 = smul.addr %s333, 4
        %s335 = scalar_lea.vmem %s3, %s334
        %p336 = scmp.lt.s32.totalorder %s21, 1
        %s337 = scalar_select %p336, %s21, 1
        %s338 = smul.addr %s337, 4
        %s339 = scalar_lea.vmem %s4, %s338
        %p340 = scmp.lt.s32.totalorder %s21, 1
        %s341 = scalar_select %p340, %s21, 1
        %s342 = scalar_lea.vmem %s5, %s341
        %p343 = scmp.lt.s32.totalorder %s21, 1
        %s344 = scalar_select %p343, %s21, 1
        %s345 = scalar_lea.vmem %s6, %s344
        %v346 = vlaneseq
        %v347 = vand.u32 %v346, 127
        %v348 = vadd.s32 %v347, 128
        %v349 = vld [vmem:[%s331] sm:$0xf]
        %350 = vset.pattern.permute.xlu0 0
        %351 = vperm.xlu0 %350, %v349
        %v352 = vpop.permute.xlu0 %351
        %vm353 = vcmp.eq.s32.totalorder %v347, %v352
        %vm354 = vcmp.eq.s32.totalorder %v348, %v352
        %v355 = vsel %vm353, 1, 0
        %v356 = vsel %vm354, 1, 0
        %v357 = vcvt.s32.f32 %v355
        %v358 = vcvt.s32.f32 %v356
        %v359 = vld [vmem:[%s276] sm:$0xff]
        %v360 = vld [vmem:[%s276 + $0x8] sm:$0xff]
        %361 = vmatprep.subr.mxu0 %v360
        %362 = vmatpush1.xpose.msra.mxu0 %v359
        %363 = vmatprep.subr.mxu0 0.0
        %364 = vmatpush1.xpose.msra.mxu0 0.0
        %365 = vmatprep.subr.mxu0 0.0
        %366 = vmatpush1.xpose.msra.mxu0 0.0
        %367 = vmatprep.subr.mxu0 0.0
        %368 = vmatpush1.xpose.msra.mxu0 0.0
        %369 = vmatprep.subr.mxu0 0.0
        %370 = vmatpush1.xpose.msra.mxu0 0.0
        %371 = vmatprep.subr.mxu0 0.0
        %372 = vmatpush1.xpose.msra.mxu0 0.0
        %373 = vmatprep.subr.mxu0 0.0
        %374 = vmatpush1.xpose.msra.mxu0 0.0
        %375 = vmatprep.subr.mxu0 0.0
        %376 = vmatpush1.xpose.msra.mxu0 0.0
        %377 = vmatprep.subr.mxu0 0.0
        %378 = vmatpush1.xpose.msra.mxu0 0.0
        %379 = vmatprep.subr.mxu0 0.0
        %380 = vmatpush1.xpose.msra.mxu0 0.0
        %381 = vmatprep.subr.mxu0 0.0
        %382 = vmatpush1.xpose.msra.mxu0 0.0
        %383 = vmatprep.subr.mxu0 0.0
        %384 = vmatpush1.xpose.msra.mxu0 0.0
        %385 = vmatprep.subr.mxu0 0.0
        %386 = vmatpush1.xpose.msra.mxu0 0.0
        %387 = vmatprep.subr.mxu0 0.0
        %388 = vmatpush1.xpose.msra.mxu0 0.0
        %389 = vmatprep.subr.mxu0 0.0
        %390 = vmatpush1.xpose.msra.mxu0 0.0
        %391 = vmatprep.subr.mxu0 0.0
        %392 = vmatpush1.xpose.msra.mxu0 0.0
        %393 = vmatprep.subr.mxu0 0.0
        %394 = vmatpush1.xpose.msra.mxu0 0.0
        %395 = vmatprep.subr.mxu0 0.0
        %396 = vmatpush1.xpose.msra.mxu0 0.0
        %397 = vmatprep.subr.mxu0 0.0
        %398 = vmatpush1.xpose.msra.mxu0 0.0
        %399 = vmatprep.subr.mxu0 0.0
        %400 = vmatpush1.xpose.msra.mxu0 0.0
        %401 = vmatprep.subr.mxu0 0.0
        %402 = vmatpush1.xpose.msra.mxu0 0.0
        %403 = vmatprep.subr.mxu0 0.0
        %404 = vmatpush1.xpose.msra.mxu0 0.0
        %405 = vmatprep.subr.mxu0 0.0
        %406 = vmatpush1.xpose.msra.mxu0 0.0
        %407 = vmatprep.subr.mxu0 0.0
        %408 = vmatpush1.xpose.msra.mxu0 0.0
        %409 = vmatprep.subr.mxu0 0.0
        %410 = vmatpush1.xpose.msra.mxu0 0.0
        %411 = vmatprep.subr.mxu0 0.0
        %412 = vmatpush1.xpose.msra.mxu0 0.0
        %413 = vmatprep.subr.mxu0 0.0
        %414 = vmatpush1.xpose.msra.mxu0 0.0
        %415 = vmatprep.subr.mxu0 0.0
        %416 = vmatpush1.xpose.msra.mxu0 0.0
        %417 = vmatprep.subr.mxu0 0.0
        %418 = vmatpush1.xpose.msra.mxu0 0.0
        %419 = vmatprep.subr.mxu0 0.0
        %420 = vmatpush1.xpose.msra.mxu0 0.0
        %421 = vmatprep.subr.mxu0 0.0
        %422 = vmatpush1.xpose.msra.mxu0 0.0
        %423 = vmatprep.subr.mxu0 0.0
        %424 = vmatpush1.xpose.msra.mxu0 0.0
        %425 = vmatprep.mubr.f32.mxu0 %v358
        %426 = vmatmul.mubr.f32.gmra.mrb[0].mxu0 %v357
        %v427 = vpop.f32.mrb[0].mxu0
        %v428 = vadd.f32 0.0, %v427
        %v429 = vpop.f32.mrb[0].mxu0
        %430 = vdwg.mxu0
        %v431 = vld [vmem:[%s327] sm:$0xff]
        %v433 = vcombine.high %v431, %v431
        %435 = vmatprep.subr.mxu0 %v433
        %436 = vmatpush1.xpose.msra.mxu0 %v431
        %437 = vmatprep.subr.mxu0 0.0
        %438 = vmatpush1.xpose.msra.mxu0 0.0
        %439 = vmatprep.subr.mxu0 0.0
        %440 = vmatpush1.xpose.msra.mxu0 0.0
        %441 = vmatprep.subr.mxu0 0.0
        %442 = vmatpush1.xpose.msra.mxu0 0.0
        %443 = vmatprep.subr.mxu0 0.0
        %444 = vmatpush1.xpose.msra.mxu0 0.0
        %445 = vmatprep.subr.mxu0 0.0
        %446 = vmatpush1.xpose.msra.mxu0 0.0
        %447 = vmatprep.subr.mxu0 0.0
        %448 = vmatpush1.xpose.msra.mxu0 0.0
        %449 = vmatprep.subr.mxu0 0.0
        %450 = vmatpush1.xpose.msra.mxu0 0.0
        %451 = vmatprep.subr.mxu0 0.0
        %452 = vmatpush1.xpose.msra.mxu0 0.0
        %453 = vmatprep.subr.mxu0 0.0
        %454 = vmatpush1.xpose.msra.mxu0 0.0
        %455 = vmatprep.subr.mxu0 0.0
        %456 = vmatpush1.xpose.msra.mxu0 0.0
        %457 = vmatprep.subr.mxu0 0.0
        %458 = vmatpush1.xpose.msra.mxu0 0.0
        %459 = vmatprep.subr.mxu0 0.0
        %460 = vmatpush1.xpose.msra.mxu0 0.0
        %461 = vmatprep.subr.mxu0 0.0
        %462 = vmatpush1.xpose.msra.mxu0 0.0
        %463 = vmatprep.subr.mxu0 0.0
        %464 = vmatpush1.xpose.msra.mxu0 0.0
        %465 = vmatprep.subr.mxu0 0.0
        %466 = vmatpush1.xpose.msra.mxu0 0.0
        %467 = vmatprep.subr.mxu0 0.0
        %468 = vmatpush1.xpose.msra.mxu0 0.0
        %469 = vmatprep.subr.mxu0 0.0
        %470 = vmatpush1.xpose.msra.mxu0 0.0
        %471 = vmatprep.subr.mxu0 0.0
        %472 = vmatpush1.xpose.msra.mxu0 0.0
        %473 = vmatprep.subr.mxu0 0.0
        %474 = vmatpush1.xpose.msra.mxu0 0.0
        %475 = vmatprep.subr.mxu0 0.0
        %476 = vmatpush1.xpose.msra.mxu0 0.0
        %477 = vmatprep.subr.mxu0 0.0
        %478 = vmatpush1.xpose.msra.mxu0 0.0
        %479 = vmatprep.subr.mxu0 0.0
        %480 = vmatpush1.xpose.msra.mxu0 0.0
        %481 = vmatprep.subr.mxu0 0.0
        %482 = vmatpush1.xpose.msra.mxu0 0.0
        %483 = vmatprep.subr.mxu0 0.0
        %484 = vmatpush1.xpose.msra.mxu0 0.0
        %485 = vmatprep.subr.mxu0 0.0
        %486 = vmatpush1.xpose.msra.mxu0 0.0
        %487 = vmatprep.subr.mxu0 0.0
        %488 = vmatpush1.xpose.msra.mxu0 0.0
        %489 = vmatprep.subr.mxu0 0.0
        %490 = vmatpush1.xpose.msra.mxu0 0.0
        %491 = vmatprep.subr.mxu0 0.0
        %492 = vmatpush1.xpose.msra.mxu0 0.0
        %493 = vmatprep.subr.mxu0 0.0
        %494 = vmatpush1.xpose.msra.mxu0 0.0
        %495 = vmatprep.subr.mxu0 0.0
        %496 = vmatpush1.xpose.msra.mxu0 0.0
        %497 = vmatprep.subr.mxu0 0.0
        %498 = vmatpush1.xpose.msra.mxu0 0.0
        %499 = vmatprep.mubr.f32.mxu0 %v358
        %500 = vmatmul.mubr.f32.gmra.mrb[0].mxu0 %v357
        %v501 = vpop.f32.mrb[0].mxu0
        %v502 = vadd.f32 0.0, %v501
        %v503 = vpop.f32.mrb[0].mxu0
        %504 = vdwg.mxu0
        %vm505 = vcmask 60416
        %v506 = vsel %vm505, %v428, -inf
        %507 = vmax.xlane.f32.xlu0 %v506
        %v508 = vpop.xlane.xlu0 %507
        %v509 = vsub.f32 %v428, %v508
        %v510 = vmul.f32 %v509, 1.442695
        %v511 = vpow.pop %v510
        %v512 = vsel %vm505, %v511, 0.0
        %513 = vadd.xlane.f32.xlu0 %v512
        %v514 = vpop.xlane.xlu0 %513
        %v515 = vlog2.pop %v514
        %v516 = vmul.f32 %v515, 0.6931472
        %v517 = vadd.f32 %v508, %v516
        %v518 = vld [vmem:[%s335] sm:$0xf]
        %519 = vset.pattern.permute.xlu0 0
        %520 = vperm.xlu0 %519, %v518
        %v521 = vpop.permute.xlu0 %520
        %vm522 = vcmp.eq.s32.totalorder %v347, %v521
        %v523 = vsel %vm522, %v428, 0.0
        %v524 = vsel %vm505, %v523, 0.0
        %525 = vadd.xlane.f32.xlu0 %v524
        %v526 = vpop.xlane.xlu0 %525
        %v527 = vsub.f32 %v517, %v526
        %vm528 = vcmask 1043456
        %v529 = vsel %vm528, %v527, 0.0
        %v530 = vrot.slane %v529, 4
        %v531 = vadd.f32 %v529, %v530
        %v532 = vrot.slane %v531, 2
        %v533 = vadd.f32 %v531, %v532
        %v534 = vrot.slane %v533, 1
        %v535 = vadd.f32 %v533, %v534
        %v536 = vrcp.pop 4.0
        %v537 = vmul.f32 %v535, %v536
        %vm538 = vcmask 0
        %539 = vst.msk [vmem:[%s342] sm:$0x1] %vm538, %v537
        %v540 = vld [vmem:[%s339] sm:$0xf]
        %v541 = vsub.f32 %v502, %v540
        %v542 = vand.u32 2147483647, %v541
        %vm543 = vcmask 27648
        %v544 = vsel %vm543, %v542, 0.0
        %545 = vadd.xlane.f32.xlu0 %v544
        %v546 = vpop.xlane.xlu0 %545
        %v547 = vsel %vm528, %v546, 0.0
        %v548 = vrot.slane %v547, 4
        %v549 = vadd.f32 %v547, %v548
        %v550 = vrot.slane %v549, 2
        %v551 = vadd.f32 %v549, %v550
        %v552 = vrot.slane %v551, 1
        %v553 = vadd.f32 %v551, %v552
        %v554 = vrcp.pop 16.0
        %v555 = vmul.f32 %v553, %v554
        %556 = vst.msk [vmem:[%s345] sm:$0x1] %vm538, %v555
        %p557 = scmp.lt.s32.totalorder %s21, 1
        %s558 = scalar_select %p557, %s21, 1
        %s559 = scalar_lea.vmem %s5, %s558
        %p560 = scmp.lt.s32.totalorder %s21, 1
        %s561 = scalar_select %p560, %s21, 1
        %s562 = scalar_lea.vmem %s6, %s561
        // Predicated region
        $region45: #{tpu_custom_call.1} parent=39 // pred_check
          %p563 = pneg %p169
        $region46: #{tpu_custom_call.1} parent=39 // pred_check_branch
          %565 = sbr.rel (%p563) target = $region48
        $region47: #{tpu_custom_call.1} parent=39 // pred_region
          _
        $region48: #{tpu_custom_call.1} parent=39 // pred_fallthru
          _
        // Predicated region
        $region49: #{tpu_custom_call.1} parent=39 // pred_check
          %p566 = pneg %p195
        $region50: #{tpu_custom_call.1} parent=39 // pred_check_branch
          %568 = sbr.rel (%p566) target = $region52
        $region51: #{tpu_custom_call.1} parent=39 // pred_region
          _
        $region52: #{tpu_custom_call.1} parent=39 // pred_fallthru
          _
      $region40: #{tpu_custom_call.1} parent=5 // pred_fallthru
        _
      %p569 = scmp.le.s32.totalorder 2, %s16
      // Predicated region
      $region53: #{tpu_custom_call.1} parent=5 // pred_check
        %p570 = pneg %p569
      $region54: #{tpu_custom_call.1} parent=5 // pred_check_branch
        %572 = sbr.rel (%p570) target = $region56
      $region55: #{tpu_custom_call.1} parent=5 // pred_region
        %s573 = ssub.s32 %s16, 2
        // Predicated region
        $region57: #{tpu_custom_call.1} parent=55 // pred_check
          %p574 = pneg %p175
        $region58: #{tpu_custom_call.1} parent=55 // pred_check_branch
          %576 = sbr.rel (%p574) target = $region60
        $region59: #{tpu_custom_call.1} parent=55 // pred_region
          %p577 = scmp.lt.s32.totalorder %s22, 1
          %s578 = scalar_select %p577, %s22, 1
          %s579 = scalar_lea.vmem %s5, %s578
        $region60: #{tpu_custom_call.1} parent=55 // pred_fallthru
          _
        // Predicated region
        $region61: #{tpu_custom_call.1} parent=55 // pred_check
          %p580 = pneg %p201
        $region62: #{tpu_custom_call.1} parent=55 // pred_check_branch
          %582 = sbr.rel (%p580) target = $region64
        $region63: #{tpu_custom_call.1} parent=55 // pred_region
          %p583 = scmp.lt.s32.totalorder %s22, 1
          %s584 = scalar_select %p583, %s22, 1
          %s585 = scalar_lea.vmem %s6, %s584
        $region64: #{tpu_custom_call.1} parent=55 // pred_fallthru
          _
      $region56: #{tpu_custom_call.1} parent=5 // pred_fallthru
        _
    $region6: #{tpu_custom_call.1} parent=1 // loop_footer
      %s20 = sadd.s32 1, %s16
    $region7: #{tpu_custom_call.1} parent=1 // loop_footer_branch
      %15 = sbr.rel target = $region3
    $region8: #{tpu_custom_call.1} parent=1 // loop_exit
      _
    %586 = vsyncpa [#allocation3], 1
    %s587 = scalar_lea.sflag [#allocation3], 1
    %588 = vsyncpa %s587, 1

</llo_original>
